<compile_context>
chip_gen: v7x
topology: tpu7x:2x2x1
jax: 0.10.0
libtpu: 0.0.40
codegen_flags: <defaults>
</compile_context>

<pallas_src>
import functools

import jax
import jax.numpy as jnp
from jax.experimental import pallas as pl
from jax.experimental.pallas import tpu as pltpu

LANE = 128


def hybrid_pref_kernel(feat_ref, cfu_ref, cfi_ref,
                       w1_ref, b1_ref, w2_ref, b2_ref, out_ref):
    # content_user^T = relu(w1 @ feat^T + b1) ; w2 @ h + b2    (all [*, TB], lane-dense)
    h = jnp.dot(w1_ref[...], feat_ref[...],
                preferred_element_type=jnp.float32) + b1_ref[...]        # [H, TB]
    h = jnp.maximum(h, 0.0)
    content = jnp.dot(w2_ref[...], h,
                      preferred_element_type=jnp.float32) + b2_ref[...]  # [E, TB]
    # final_user = cf_user + content ; score = sum_E(final_user * cf_item)
    final_user = cfu_ref[...] + content                                  # [E, TB]
    # E sits on sublanes -> cross-sublane reduce lands on the XLU (has slack)
    # and produces a lane-dense [1, TB] row (unmasked vst).
    out_ref[...] = jnp.sum(final_user * cfi_ref[...], axis=0, keepdims=True)


def _pick_batch_tiling(B, tile_b):
    """Pick (TB, n_tiles, B_pad): lane-multiple tiles, even count, small tail pad."""
    B_lanes = pl.cdiv(B, LANE) * LANE
    cap = max(LANE, (tile_b // LANE) * LANE)
    if B_lanes <= cap:
        TB, n_tiles = B_lanes, 1
    else:
        n_tiles = pl.cdiv(B_lanes, cap)
        if n_tiles % 2:                   # even tile count -> balanced across v7x's 2 TCs
            n_tiles += 1
        # Balanced tiles at 512-lane granularity -> tail padding stays tiny.
        TB = pl.cdiv(B_lanes, n_tiles * 512) * 512
    return TB, n_tiles, n_tiles * TB


def hybrid_preference_forward(user_ids, item_ids, user_features, params,
                              *, tile_b=32768):
    """Embedding gathers in JAX (from pre-transposed tables); MLP + fuse + score
    reduction in the Pallas kernel."""
    # Gather straight into the [E, B] (lane = batch) layout the kernel wants.
    cf_user_t = params["user_emb_t"][:, user_ids]          # [E, B]
    cf_item_t = params["item_emb_t"][:, item_ids]          # [E, B]

    B = user_ids.shape[0]
    E = cf_user_t.shape[0]
    F = user_features.shape[1]
    H = params["w1"].shape[0]

    TB, n_tiles, B_pad = _pick_batch_tiling(B, tile_b)

    def pad_lanes(x):                      # [D, B] -> [D, B_pad]
        return x if B_pad == B else jnp.pad(x, ((0, 0), (0, B_pad - B)))

    # Module interface hands us [B, F]; transposing here costs one extra
    # read+write of the (small, F=8) feature matrix.
    feat_t = pad_lanes(user_features.T)    # [F, B_pad]
    cfu_t = pad_lanes(cf_user_t)           # [E, B_pad]
    cfi_t = pad_lanes(cf_item_t)           # [E, B_pad]

    # PyTorch Linear layout [out, in] is exactly what the transposed kernel wants.
    w1 = params["w1"]                       # [H, F]
    b1 = params["b1"].reshape(H, 1)         # [H, 1]
    w2 = params["w2"]                       # [E, H]
    b2 = params["b2"].reshape(E, 1)         # [E, 1]

    data_spec = lambda d: pl.BlockSpec((d, TB), lambda i: (0, i))
    const_spec = lambda shape: pl.BlockSpec(shape, lambda i: (0, 0))

    flops = 2 * B_pad * (F * H + H * E) + 4 * B_pad * E
    bytes_accessed = 4 * (B_pad * (F + 2 * E + 1) + H * F + H + E * H + E)

    scores = pl.pallas_call(
        hybrid_pref_kernel,
        out_shape=jax.ShapeDtypeStruct((1, B_pad), jnp.float32),
        grid=(n_tiles,),
        in_specs=[
            data_spec(F),            # user_features^T tile [F, TB]
            data_spec(E),            # cf_user^T tile       [E, TB]
            data_spec(E),            # cf_item^T tile       [E, TB]
            const_spec((H, F)),      # w1 (VMEM-resident across tiles)
            const_spec((H, 1)),      # b1
            const_spec((E, H)),      # w2
            const_spec((E, 1)),      # b2
        ],
        out_specs=pl.BlockSpec((1, TB), lambda i: (0, i)),
        compiler_params=pltpu.CompilerParams(
            dimension_semantics=("parallel",),      # batch tiles -> megacore sharding
            vmem_limit_bytes=32 * 1024 * 1024,      # pin; covers TB<=64K double-buffered
        ),
        cost_estimate=pl.CostEstimate(
            flops=flops, transcendentals=0, bytes_accessed=bytes_accessed),
    )(feat_t, cfu_t, cfi_t, w1, b1, w2, b2)

    return scores[0, :B]             # [B]  (padded tail columns sliced off)


def init_params(key, n_users, n_items, user_feat_dim, embedding_dim=16, hidden=32):
    ks = jax.random.split(key, 6)
    return {
        # Embedding tables stored pre-transposed: [E, n_*] so a column gather
        # directly yields the kernel's [E, B] layout.
        "user_emb_t": jax.random.normal(ks[0], (embedding_dim, n_users), jnp.float32),
        "item_emb_t": jax.random.normal(ks[1], (embedding_dim, n_items), jnp.float32),
        # PyTorch nn.Linear layout: weight [out, in], bias [out]
        "w1": jax.random.normal(ks[2], (hidden, user_feat_dim), jnp.float32) * 0.1,
        "b1": jax.random.normal(ks[3], (hidden,), jnp.float32) * 0.1,
        "w2": jax.random.normal(ks[4], (embedding_dim, hidden), jnp.float32) * 0.1,
        "b2": jax.random.normal(ks[5], (embedding_dim,), jnp.float32) * 0.1,
    }


def reference_forward(user_ids, item_ids, user_features, params):
    cf_user = params["user_emb_t"].T[user_ids]
    cf_item = params["item_emb_t"].T[item_ids]
    h = jnp.maximum(user_features @ params["w1"].T + params["b1"], 0.0)
    content_user = h @ params["w2"].T + params["b2"]
    final_user = cf_user + content_user
    return jnp.sum(final_user * cf_item, axis=1)


if __name__ == "__main__":
    key = jax.random.PRNGKey(0)
    n_users, n_items, user_feat_dim, embedding_dim = 10, 20, 8, 16
    batch = 8

    k_param, k_uid, k_iid, k_feat = jax.random.split(key, 4)
    params = init_params(k_param, n_users, n_items, user_feat_dim, embedding_dim)

    user_ids = jax.random.randint(k_uid, (batch,), 0, n_users)
    item_ids = jax.random.randint(k_iid, (batch,), 0, n_items)
    user_features = jax.random.normal(k_feat, (batch, user_feat_dim), jnp.float32)

    fwd = jax.jit(functools.partial(hybrid_preference_forward))
    scores = fwd(user_ids, item_ids, user_features, params)
    scores = jax.block_until_ready(scores)

    ref = reference_forward(user_ids, item_ids, user_features, params)
    assert scores.shape == (batch,)
    assert jnp.allclose(scores, ref, atol=1e-4, rtol=1e-4), (scores, ref)

    print("KERNEL_OK")
</pallas_src>

<mosaic_0001>
module attributes {stable_mosaic.version = 11 : i64} {
  func.func @hybrid_pref_kernel(%arg0: i32, %arg1: memref<8x128xf32, #tpu.memory_space<vmem>>, %arg2: memref<16x128xf32, #tpu.memory_space<vmem>>, %arg3: memref<16x128xf32, #tpu.memory_space<vmem>>, %arg4: memref<32x8xf32, #tpu.memory_space<vmem>>, %arg5: memref<32x1xf32, #tpu.memory_space<vmem>>, %arg6: memref<16x32xf32, #tpu.memory_space<vmem>>, %arg7: memref<16x1xf32, #tpu.memory_space<vmem>>, %arg8: memref<1x128xf32, #tpu.memory_space<vmem>>) attributes {dimension_semantics = [#tpu.dimension_semantics<parallel>], iteration_bounds = array<i64: 1>, scalar_prefetch = 0 : i64, scratch_operands = 0 : i64, tpu.core_type = #tpu.core_type<tc>, window_params = [{transform_indices = @transform_0, window_bounds = array<i64: 8, 128>}, {transform_indices = @transform_1, window_bounds = array<i64: 16, 128>}, {transform_indices = @transform_2, window_bounds = array<i64: 16, 128>}, {pipeline_mode = #tpu.pipeline_mode<synchronous>, transform_indices = @transform_3, window_bounds = array<i64: 32, 8>}, {pipeline_mode = #tpu.pipeline_mode<synchronous>, transform_indices = @transform_4, window_bounds = array<i64: 32, 1>}, {pipeline_mode = #tpu.pipeline_mode<synchronous>, transform_indices = @transform_5, window_bounds = array<i64: 16, 32>}, {pipeline_mode = #tpu.pipeline_mode<synchronous>, transform_indices = @transform_6, window_bounds = array<i64: 16, 1>}, {transform_indices = @transform_7, window_bounds = array<i64: 1, 128>}]} {
    %c0 = arith.constant 0 : index
    %c0_0 = arith.constant 0 : index
    %0 = vector.load %arg4[%c0, %c0_0] : memref<32x8xf32, #tpu.memory_space<vmem>>, vector<32x8xf32>
    %c0_1 = arith.constant 0 : index
    %c0_2 = arith.constant 0 : index
    %1 = vector.load %arg1[%c0_1, %c0_2] : memref<8x128xf32, #tpu.memory_space<vmem>>, vector<8x128xf32>
    %cst = arith.constant dense<0.000000e+00> : vector<32x128xf32>
    %2 = tpu.matmul %0, %1, %cst {dimension_numbers = #tpu.dot_dimension_numbers<[1], [0], [0], [1], [0, 0, 1, 1], [], []>} : vector<32x8xf32>, vector<8x128xf32>, vector<32x128xf32> -> vector<32x128xf32>
    %c0_3 = arith.constant 0 : index
    %c0_4 = arith.constant 0 : index
    %3 = vector.load %arg5[%c0_3, %c0_4] : memref<32x1xf32, #tpu.memory_space<vmem>>, vector<32x1xf32>
    %4 = vector.broadcast %3 : vector<32x1xf32> to vector<32x128xf32>
    %5 = arith.addf %2, %4 : vector<32x128xf32>
    %cst_5 = arith.constant 0.000000e+00 : f32
    %6 = vector.broadcast %cst_5 : f32 to vector<32x128xf32>
    %7 = arith.maximumf %5, %6 : vector<32x128xf32>
    %c0_6 = arith.constant 0 : index
    %c0_7 = arith.constant 0 : index
    %8 = vector.load %arg6[%c0_6, %c0_7] : memref<16x32xf32, #tpu.memory_space<vmem>>, vector<16x32xf32>
    %cst_8 = arith.constant dense<0.000000e+00> : vector<16x128xf32>
    %9 = tpu.matmul %8, %7, %cst_8 {dimension_numbers = #tpu.dot_dimension_numbers<[1], [0], [0], [1], [0, 0, 1, 1], [], []>} : vector<16x32xf32>, vector<32x128xf32>, vector<16x128xf32> -> vector<16x128xf32>
    %c0_9 = arith.constant 0 : index
    %c0_10 = arith.constant 0 : index
    %10 = vector.load %arg7[%c0_9, %c0_10] : memref<16x1xf32, #tpu.memory_space<vmem>>, vector<16x1xf32>
    %11 = vector.broadcast %10 : vector<16x1xf32> to vector<16x128xf32>
    %12 = arith.addf %9, %11 : vector<16x128xf32>
    %c0_11 = arith.constant 0 : index
    %c0_12 = arith.constant 0 : index
    %13 = vector.load %arg2[%c0_11, %c0_12] : memref<16x128xf32, #tpu.memory_space<vmem>>, vector<16x128xf32>
    %14 = arith.addf %13, %12 : vector<16x128xf32>
    %c0_13 = arith.constant 0 : index
    %c0_14 = arith.constant 0 : index
    %15 = vector.load %arg3[%c0_13, %c0_14] : memref<16x128xf32, #tpu.memory_space<vmem>>, vector<16x128xf32>
    %16 = arith.mulf %14, %15 : vector<16x128xf32>
    %cst_15 = arith.constant dense<0.000000e+00> : vector<128xf32>
    %17 = vector.multi_reduction <add>, %16, %cst_15 [0] : vector<16x128xf32> to vector<128xf32>
    %18 = vector.shape_cast %17 : vector<128xf32> to vector<1x128xf32>
    %c0_16 = arith.constant 0 : index
    %c0_17 = arith.constant 0 : index
    %19 = vector.load %arg8[%c0_16, %c0_17] : memref<1x128xf32, #tpu.memory_space<vmem>>, vector<1x128xf32>
    tpu.vector_store %arg8[%c0_16, %c0_17], %18 {strides = array<i32>} : memref<1x128xf32, #tpu.memory_space<vmem>>, vector<1x128xf32>,
    return
  }
  func.func @transform_0(%arg0: i32) -> (i32, i32) {
    %c0_i32 = arith.constant 0 : i32
    %c0_i32_0 = arith.constant 0 : i32
    return %c0_i32, %arg0 : i32, i32
  }
  func.func @transform_1(%arg0: i32) -> (i32, i32) {
    %c0_i32 = arith.constant 0 : i32
    %c0_i32_0 = arith.constant 0 : i32
    return %c0_i32, %arg0 : i32, i32
  }
  func.func @transform_2(%arg0: i32) -> (i32, i32) {
    %c0_i32 = arith.constant 0 : i32
    %c0_i32_0 = arith.constant 0 : i32
    return %c0_i32, %arg0 : i32, i32
  }
  func.func @transform_3(%arg0: i32) -> (i32, i32) {
    %c0_i32 = arith.constant 0 : i32
    %c0_i32_0 = arith.constant 0 : i32
    %c0_i32_1 = arith.constant 0 : i32
    return %c0_i32, %c0_i32_0 : i32, i32
  }
  func.func @transform_4(%arg0: i32) -> (i32, i32) {
    %c0_i32 = arith.constant 0 : i32
    %c0_i32_0 = arith.constant 0 : i32
    %c0_i32_1 = arith.constant 0 : i32
    return %c0_i32, %c0_i32_0 : i32, i32
  }
  func.func @transform_5(%arg0: i32) -> (i32, i32) {
    %c0_i32 = arith.constant 0 : i32
    %c0_i32_0 = arith.constant 0 : i32
    %c0_i32_1 = arith.constant 0 : i32
    return %c0_i32, %c0_i32_0 : i32, i32
  }
  func.func @transform_6(%arg0: i32) -> (i32, i32) {
    %c0_i32 = arith.constant 0 : i32
    %c0_i32_0 = arith.constant 0 : i32
    %c0_i32_1 = arith.constant 0 : i32
    return %c0_i32, %c0_i32_0 : i32, i32
  }
  func.func @transform_7(%arg0: i32) -> (i32, i32) {
    %c0_i32 = arith.constant 0 : i32
    %c0_i32_0 = arith.constant 0 : i32
    return %c0_i32, %arg0 : i32, i32
  }
}

</mosaic_0001>

<llo_original>
// kernel: hybrid_preference_forward.1
$region0: #{hybrid_preference_forward.1}
  #allocation0 [shape = 'u32[]', space=smem, size = 0x4, offset = 0x4, fixed_abs, tag = 'smem constant byte address 0x4 - core index']
  #allocation1 [shape = 'u32[144,128]{1,0:T(1,128)}', space=vmem, size = 0x12000, scoped, tag = 'internal scratch']
  %s0 = inlined_call_operand.vmem [shape: f32[8,128], index: 0, kind: input, shape index: {}]
  %s1 = inlined_call_operand.vmem [shape: f32[16,128], index: 1, kind: input, shape index: {}]
  %s2 = inlined_call_operand.vmem [shape: f32[16,128], index: 2, kind: input, shape index: {}]
  %s3 = inlined_call_operand.vmem [shape: f32[32,8], index: 3, kind: input, shape index: {}]
  %s4 = inlined_call_operand.vmem [shape: f32[32,1], index: 4, kind: input, shape index: {}]
  %s5 = inlined_call_operand.vmem [shape: f32[16,32], index: 5, kind: input, shape index: {}]
  %s6 = inlined_call_operand.vmem [shape: f32[16,1], index: 6, kind: input, shape index: {}]
  %s7 = inlined_call_operand.vmem [shape: f32[1,128], index: 7, kind: output, shape index: {}]
  %s8 = sld [smem:[#allocation0]]
  $region38: #{hybrid_preference_forward.1} parent=0
    _
  %s10 = ssub.s32 1, %s8
  %s11 = scalar_select 0, %s10, %s8
  // Predicated region
  $region2: #{hybrid_preference_forward.1} parent=0 // pred_check
    _
  $region3: #{hybrid_preference_forward.1} parent=0 // pred_check_branch
    %13 = sbr.rel (0) target = $region5
  $region4: #{hybrid_preference_forward.1} parent=0 // pred_region
    _
  $region5: #{hybrid_preference_forward.1} parent=0 // pred_fallthru
    _
  // Predicated region
  $region6: #{hybrid_preference_forward.1} parent=0 // pred_check
    _
  $region7: #{hybrid_preference_forward.1} parent=0 // pred_check_branch
    %15 = sbr.rel (0) target = $region9
  $region8: #{hybrid_preference_forward.1} parent=0 // pred_region
    _
  $region9: #{hybrid_preference_forward.1} parent=0 // pred_fallthru
    _
  // Predicated region
  $region10: #{hybrid_preference_forward.1} parent=0 // pred_check
    _
  $region11: #{hybrid_preference_forward.1} parent=0 // pred_check_branch
    %17 = sbr.rel (0) target = $region13
  $region12: #{hybrid_preference_forward.1} parent=0 // pred_region
    _
  $region13: #{hybrid_preference_forward.1} parent=0 // pred_fallthru
    _
  // Predicated region
  $region14: #{hybrid_preference_forward.1} parent=0 // pred_check
    _
  $region15: #{hybrid_preference_forward.1} parent=0 // pred_check_branch
    %19 = sbr.rel (0) target = $region17
  $region16: #{hybrid_preference_forward.1} parent=0 // pred_region
    _
  $region17: #{hybrid_preference_forward.1} parent=0 // pred_fallthru
    _
  // Predicated region
  $region18: #{hybrid_preference_forward.1} parent=0 // pred_check
    _
  $region19: #{hybrid_preference_forward.1} parent=0 // pred_check_branch
    %21 = sbr.rel (0) target = $region21
  $region20: #{hybrid_preference_forward.1} parent=0 // pred_region
    _
  $region21: #{hybrid_preference_forward.1} parent=0 // pred_fallthru
    _
  // Predicated region
  $region22: #{hybrid_preference_forward.1} parent=0 // pred_check
    _
  $region23: #{hybrid_preference_forward.1} parent=0 // pred_check_branch
    %23 = sbr.rel (0) target = $region25
  $region24: #{hybrid_preference_forward.1} parent=0 // pred_region
    _
  $region25: #{hybrid_preference_forward.1} parent=0 // pred_fallthru
    _
  // Predicated region
  $region26: #{hybrid_preference_forward.1} parent=0 // pred_check
    _
  $region27: #{hybrid_preference_forward.1} parent=0 // pred_check_branch
    %25 = sbr.rel (0) target = $region29
  $region28: #{hybrid_preference_forward.1} parent=0 // pred_region
    _
  $region29: #{hybrid_preference_forward.1} parent=0 // pred_fallthru
    _
  %v26 = vld [vmem:[%s3] sm:$0xff]
  %v27 = vld [vmem:[%s3 + $0x8] sm:$0xff]
  %v28 = vld [vmem:[%s3 + $0x10] sm:$0xff]
  %v29 = vld [vmem:[%s3 + $0x18] sm:$0xff]
  %v30 = vld [vmem:[%s0] sm:$0xff]
  %v31 = vld [vmem:[%s4] sm:$0xff]
  %v32 = vld [vmem:[%s4 + $0x8] sm:$0xff]
  %v33 = vld [vmem:[%s4 + $0x10] sm:$0xff]
  %v34 = vld [vmem:[%s4 + $0x18] sm:$0xff]
  %36 = vset.pattern.permute.xlu0 0
  %37 = vperm.xlu0 %36, %v31
  %v38 = vpop.permute.xlu0 %37
  %41 = vset.pattern.permute.xlu0 0
  %42 = vperm.xlu0 %41, %v32
  %v43 = vpop.permute.xlu0 %42
  %46 = vset.pattern.permute.xlu0 0
  %47 = vperm.xlu0 %46, %v33
  %v48 = vpop.permute.xlu0 %47
  %51 = vset.pattern.permute.xlu0 0
  %52 = vperm.xlu0 %51, %v34
  %v53 = vpop.permute.xlu0 %52
  %vm55 = vcmask 64512
  %v57 = vsel %vm55, %v26, 0
  %v60 = vsel %vm55, %v27, 0
  %v63 = vsel %vm55, %v28, 0
  %v66 = vsel %vm55, %v29, 0
  %68 = vmatprep.subr.mxu0 0.0
  %69 = vmatpush1.msra.mxu0 %v30
  %70 = vmatprep.subr.mxu0 0.0
  %71 = vmatpush1.msra.mxu0 0.0
  %72 = vmatprep.subr.mxu0 0.0
  %73 = vmatpush1.msra.mxu0 0.0
  %74 = vmatprep.subr.mxu0 0.0
  %75 = vmatpush1.msra.mxu0 0.0
  %76 = vmatprep.subr.mxu0 0.0
  %77 = vmatpush1.msra.mxu0 0.0
  %78 = vmatprep.subr.mxu0 0.0
  %79 = vmatpush1.msra.mxu0 0.0
  %80 = vmatprep.subr.mxu0 0.0
  %81 = vmatpush1.msra.mxu0 0.0
  %82 = vmatprep.subr.mxu0 0.0
  %83 = vmatpush1.msra.mxu0 0.0
  %84 = vmatprep.subr.mxu0 0.0
  %85 = vmatpush1.msra.mxu0 0.0
  %86 = vmatprep.subr.mxu0 0.0
  %87 = vmatpush1.msra.mxu0 0.0
  %88 = vmatprep.subr.mxu0 0.0
  %89 = vmatpush1.msra.mxu0 0.0
  %90 = vmatprep.subr.mxu0 0.0
  %91 = vmatpush1.msra.mxu0 0.0
  %92 = vmatprep.subr.mxu0 0.0
  %93 = vmatpush1.msra.mxu0 0.0
  %94 = vmatprep.subr.mxu0 0.0
  %95 = vmatpush1.msra.mxu0 0.0
  %96 = vmatprep.subr.mxu0 0.0
  %97 = vmatpush1.msra.mxu0 0.0
  %98 = vmatprep.subr.mxu0 0.0
  %99 = vmatpush1.msra.mxu0 0.0
  %100 = vmatprep.subr.mxu0 0.0
  %101 = vmatpush1.msra.mxu0 0.0
  %102 = vmatprep.subr.mxu0 0.0
  %103 = vmatpush1.msra.mxu0 0.0
  %104 = vmatprep.subr.mxu0 0.0
  %105 = vmatpush1.msra.mxu0 0.0
  %106 = vmatprep.subr.mxu0 0.0
  %107 = vmatpush1.msra.mxu0 0.0
  %108 = vmatprep.subr.mxu0 0.0
  %109 = vmatpush1.msra.mxu0 0.0
  %110 = vmatprep.subr.mxu0 0.0
  %111 = vmatpush1.msra.mxu0 0.0
  %112 = vmatprep.subr.mxu0 0.0
  %113 = vmatpush1.msra.mxu0 0.0
  %114 = vmatprep.subr.mxu0 0.0
  %115 = vmatpush1.msra.mxu0 0.0
  %116 = vmatprep.subr.mxu0 0.0
  %117 = vmatpush1.msra.mxu0 0.0
  %118 = vmatprep.subr.mxu0 0.0
  %119 = vmatpush1.msra.mxu0 0.0
  %120 = vmatprep.subr.mxu0 0.0
  %121 = vmatpush1.msra.mxu0 0.0
  %122 = vmatprep.subr.mxu0 0.0
  %123 = vmatpush1.msra.mxu0 0.0
  %124 = vmatprep.subr.mxu0 0.0
  %125 = vmatpush1.msra.mxu0 0.0
  %126 = vmatprep.subr.mxu0 0.0
  %127 = vmatpush1.msra.mxu0 0.0
  %128 = vmatprep.subr.mxu0 0.0
  %129 = vmatpush1.msra.mxu0 0.0
  %130 = vmatprep.subr.mxu0 0.0
  %131 = vmatpush1.msra.mxu0 0.0
  %132 = vmatprep.mubr.f32.mxu0 0.0
  %133 = vmatmul.mubr.f32.gmra.mrb[0].mxu0 %v57
  %v134 = vpop.f32.mrb[0].mxu0
  %v135 = vadd.f32 %v38, %v134
  %v136 = vpop.f32.mrb[0].mxu0
  %137 = vmatprep.mubr.f32.mxu0 0.0
  %138 = vmatmul.mubr.f32.gmra.mrb[0].mxu0 %v60
  %v139 = vpop.f32.mrb[0].mxu0
  %v140 = vadd.f32 %v43, %v139
  %v141 = vpop.f32.mrb[0].mxu0
  %142 = vmatprep.mubr.f32.mxu0 0.0
  %143 = vmatmul.mubr.f32.gmra.mrb[0].mxu0 %v63
  %v144 = vpop.f32.mrb[0].mxu0
  %v145 = vadd.f32 %v48, %v144
  %v146 = vpop.f32.mrb[0].mxu0
  %147 = vmatprep.mubr.f32.mxu0 0.0
  %148 = vmatmul.mubr.f32.gmra.mrb[0].mxu0 %v66
  %v149 = vpop.f32.mrb[0].mxu0
  %v150 = vadd.f32 %v53, %v149
  %v151 = vpop.f32.mrb[0].mxu0
  %152 = vdwg.mxu0
  %v153 = vmax.f32 %v135, 0.0
  %v154 = vmax.f32 %v140, 0.0
  %v155 = vmax.f32 %v145, 0.0
  %v156 = vmax.f32 %v150, 0.0
  %v157 = vld [vmem:[%s5] sm:$0xff]
  %v158 = vld [vmem:[%s5 + $0x8] sm:$0xff]
  %v159 = vld [vmem:[%s6] sm:$0xff]
  %v160 = vld [vmem:[%s6 + $0x8] sm:$0xff]
  %162 = vset.pattern.permute.xlu0 0
  %163 = vperm.xlu0 %162, %v159
  %v164 = vpop.permute.xlu0 %163
  %167 = vset.pattern.permute.xlu0 0
  %168 = vperm.xlu0 %167, %v160
  %v169 = vpop.permute.xlu0 %168
  %vm171 = vcmask 261120
  %v173 = vsel %vm171, %v157, 0
  %v176 = vsel %vm171, %v158, 0
  %178 = vmatprep.subr.mxu0 0.0
  %179 = vmatpush1.msra.mxu0 %v153
  %180 = vmatprep.subr.mxu0 0.0
  %181 = vmatpush1.msra.mxu0 %v154
  %182 = vmatprep.subr.mxu0 0.0
  %183 = vmatpush1.msra.mxu0 %v155
  %184 = vmatprep.subr.mxu0 0.0
  %185 = vmatpush1.msra.mxu0 %v156
  %186 = vmatprep.subr.mxu0 0.0
  %187 = vmatpush1.msra.mxu0 0.0
  %188 = vmatprep.subr.mxu0 0.0
  %189 = vmatpush1.msra.mxu0 0.0
  %190 = vmatprep.subr.mxu0 0.0
  %191 = vmatpush1.msra.mxu0 0.0
  %192 = vmatprep.subr.mxu0 0.0
  %193 = vmatpush1.msra.mxu0 0.0
  %194 = vmatprep.subr.mxu0 0.0
  %195 = vmatpush1.msra.mxu0 0.0
  %196 = vmatprep.subr.mxu0 0.0
  %197 = vmatpush1.msra.mxu0 0.0
  %198 = vmatprep.subr.mxu0 0.0
  %199 = vmatpush1.msra.mxu0 0.0
  %200 = vmatprep.subr.mxu0 0.0
  %201 = vmatpush1.msra.mxu0 0.0
  %202 = vmatprep.subr.mxu0 0.0
  %203 = vmatpush1.msra.mxu0 0.0
  %204 = vmatprep.subr.mxu0 0.0
  %205 = vmatpush1.msra.mxu0 0.0
  %206 = vmatprep.subr.mxu0 0.0
  %207 = vmatpush1.msra.mxu0 0.0
  %208 = vmatprep.subr.mxu0 0.0
  %209 = vmatpush1.msra.mxu0 0.0
  %210 = vmatprep.subr.mxu0 0.0
  %211 = vmatpush1.msra.mxu0 0.0
  %212 = vmatprep.subr.mxu0 0.0
  %213 = vmatpush1.msra.mxu0 0.0
  %214 = vmatprep.subr.mxu0 0.0
  %215 = vmatpush1.msra.mxu0 0.0
  %216 = vmatprep.subr.mxu0 0.0
  %217 = vmatpush1.msra.mxu0 0.0
  %218 = vmatprep.subr.mxu0 0.0
  %219 = vmatpush1.msra.mxu0 0.0
  %220 = vmatprep.subr.mxu0 0.0
  %221 = vmatpush1.msra.mxu0 0.0
  %222 = vmatprep.subr.mxu0 0.0
  %223 = vmatpush1.msra.mxu0 0.0
  %224 = vmatprep.subr.mxu0 0.0
  %225 = vmatpush1.msra.mxu0 0.0
  %226 = vmatprep.subr.mxu0 0.0
  %227 = vmatpush1.msra.mxu0 0.0
  %228 = vmatprep.subr.mxu0 0.0
  %229 = vmatpush1.msra.mxu0 0.0
  %230 = vmatprep.subr.mxu0 0.0
  %231 = vmatpush1.msra.mxu0 0.0
  %232 = vmatprep.subr.mxu0 0.0
  %233 = vmatpush1.msra.mxu0 0.0
  %234 = vmatprep.subr.mxu0 0.0
  %235 = vmatpush1.msra.mxu0 0.0
  %236 = vmatprep.subr.mxu0 0.0
  %237 = vmatpush1.msra.mxu0 0.0
  %238 = vmatprep.subr.mxu0 0.0
  %239 = vmatpush1.msra.mxu0 0.0
  %240 = vmatprep.subr.mxu0 0.0
  %241 = vmatpush1.msra.mxu0 0.0
  %242 = vmatprep.mubr.f32.mxu0 0.0
  %243 = vmatmul.mubr.f32.gmra.mrb[0].mxu0 %v173
  %v244 = vpop.f32.mrb[0].mxu0
  %v245 = vadd.f32 %v164, %v244
  %v246 = vpop.f32.mrb[0].mxu0
  %247 = vmatprep.mubr.f32.mxu0 0.0
  %248 = vmatmul.mubr.f32.gmra.mrb[0].mxu0 %v176
  %v249 = vpop.f32.mrb[0].mxu0
  %v250 = vadd.f32 %v169, %v249
  %v251 = vpop.f32.mrb[0].mxu0
  %252 = vdwg.mxu0
  %v253 = vld [vmem:[%s1] sm:$0xff]
  %v254 = vld [vmem:[%s1 + $0x8] sm:$0xff]
  %v255 = vadd.f32 %v253, %v245
  %v256 = vadd.f32 %v254, %v250
  %v257 = vld [vmem:[%s2] sm:$0xff]
  %v258 = vld [vmem:[%s2 + $0x8] sm:$0xff]
  %v259 = vmul.f32 %v255, %v257
  %v260 = vmul.f32 %v256, %v258
  %v261 = vadd.f32 %v259, %v260
  %v262 = vrot.slane %v261, 4
  %v263 = vadd.f32 %v261, %v262
  %v264 = vrot.slane %v263, 2
  %v265 = vadd.f32 %v263, %v264
  %v266 = vrot.slane %v265, 1
  %v267 = vadd.f32 %v265, %v266
  %268 = vst [vmem:[%s7] sm:$0x1] %v267
  // Predicated region
  $region30: #{hybrid_preference_forward.1} parent=0 // pred_check
    _
  $region31: #{hybrid_preference_forward.1} parent=0 // pred_check_branch
    %270 = sbr.rel (0) target = $region33
  $region32: #{hybrid_preference_forward.1} parent=0 // pred_region
    _
  $region33: #{hybrid_preference_forward.1} parent=0 // pred_fallthru
    _
  // Predicated region
  $region34: #{hybrid_preference_forward.1} parent=0 // pred_check
    _
  $region35: #{hybrid_preference_forward.1} parent=0 // pred_check_branch
    %272 = sbr.rel (0) target = $region37
  $region36: #{hybrid_preference_forward.1} parent=0 // pred_region
    _
  $region37: #{hybrid_preference_forward.1} parent=0 // pred_fallthru
    _

</llo_original>
